<compile_context>
chip_gen: v6e
topology: v6e:2x2x1
jax: 0.10.0
libtpu: 0.0.40
codegen_flags: <defaults>
</compile_context>

<pallas_src>
import jax
import jax.numpy as jnp
from jax.experimental import pallas as pl
from jax.experimental.pallas import tpu as pltpu

LANES = 128


def _make_psnr_partial_kernel(rows, tile_rows, tiles_per_core, needs_mask):
    """Builds the per-tile squared-difference accumulation kernel."""

    def kernel(x_ref, y_ref, acc_ref):
        # x_ref, y_ref: (tile_rows, 128) tiles of the flattened inputs.
        # acc_ref:      (tile_rows, 128) f32 per-core partial-sum output block
        #               (same block across the "arbitrary" axis => resident
        #               accumulator).
        c = pl.program_id(0)  # TensorCore split ("parallel")
        i = pl.program_id(1)  # row-tile loop  ("arbitrary")

        @pl.when(i == 0)
        def _():
            acc_ref[...] = jnp.zeros_like(acc_ref)

        # Cast in-kernel (keeps HBM traffic at the source dtype width); the
        # 1/255 scale is factored out and applied once in the epilogue.
        d = x_ref[...].astype(jnp.float32) - y_ref[...].astype(jnp.float32)

        if needs_mask:
            # Rows past the true end of the array live in unspecified
            # out-of-bounds block memory — zero them before squaring.
            row0 = (c * tiles_per_core + i) * tile_rows
            rid = row0 + jax.lax.broadcasted_iota(
                jnp.int32, (tile_rows, LANES), 0
            )
            d = jnp.where(rid < rows, d, 0.0)

        acc_ref[...] += d * d

    return kernel


def psnr_loss(x, y, *, tile_rows=1024):
    assert x.shape == y.shape
    n = x.size  # static at trace time

    xf = x.reshape(-1)
    yf = y.reshape(-1)

    rem = n % LANES
    if rem:
        # Rare ragged case: minimal (<128-element) pad to a lane multiple.
        # Padded zeros contribute 0 to the squared-difference sum, so exact.
        pad = LANES - rem
        xf = jnp.pad(xf, (0, pad))
        yf = jnp.pad(yf, (0, pad))

    rows = xf.size // LANES
    xf = xf.reshape(rows, LANES)
    yf = yf.reshape(rows, LANES)

    tile = min(tile_rows, rows)            # == rows (full dim) for small inputs
    tiles_total = pl.cdiv(rows, tile)
    num_cores = min(2, tiles_total)        # v7x dual-TC split; 1 TC elsewhere
    tpc = pl.cdiv(tiles_total, num_cores)  # tiles per core (virtual coverage)
    needs_mask = num_cores * tpc * tile > rows

    def in_map(c, i):
        # Clamp so redundant trailing (fully-masked) tiles never index past the
        # array; the logical-row mask zeroes their contribution.
        return (jnp.minimum(c * tpc + i, tiles_total - 1), 0)

    kernel = _make_psnr_partial_kernel(rows, tile, tpc, needs_mask)

    partials = pl.pallas_call(
        kernel,
        out_shape=jax.ShapeDtypeStruct((num_cores, tile, LANES), jnp.float32),
        grid=(num_cores, tpc),
        in_specs=[
            pl.BlockSpec((tile, LANES), in_map),
            pl.BlockSpec((tile, LANES), in_map),
        ],
        out_specs=pl.BlockSpec((None, tile, LANES), lambda c, i: (c, 0, 0)),
        compiler_params=pltpu.CompilerParams(
            dimension_semantics=("parallel", "arbitrary"),
        ),
    )(xf, yf)

    # Tiny epilogue (few KiB): combine per-core/per-lane partials, apply the
    # factored-out 1/255^2 and 1/n scales, then the scalar sqrt/log10.
    mse = jnp.sum(partials) * (1.0 / (255.0 * 255.0 * float(n)))
    pixel_max = 1.0
    # Note: mse == 0 (identical inputs) gives +inf, matching the PyTorch ref.
    return 20.0 * jnp.log10(pixel_max / jnp.sqrt(mse))


def psnr_loss_ref(x, y):
    xf = x.astype(jnp.float32)
    yf = y.astype(jnp.float32)
    mse = jnp.mean((xf / 255.0 - yf / 255.0) ** 2)
    return 20.0 * jnp.log10(1.0 / jnp.sqrt(mse))


if __name__ == "__main__":
    key = jax.random.PRNGKey(0)
    k1, k2 = jax.random.split(key)
    # NCHW inputs, image-like values in [0, 255]
    x = jax.random.uniform(k1, (2, 4, 16, 16), jnp.float32, 0.0, 255.0)
    y = jax.random.uniform(k2, (2, 4, 16, 16), jnp.float32, 0.0, 255.0)

    out = psnr_loss(x, y)
    out = jax.block_until_ready(out)

    ref = psnr_loss_ref(x, y)
    assert jnp.allclose(out, ref, rtol=1e-4, atol=1e-4), (out, ref)
    print("KERNEL_OK")
</pallas_src>

<mosaic_0001>
module attributes {stable_mosaic.version = 11 : i64} {
  func.func @kernel(%arg0: i32, %arg1: i32, %arg2: memref<16x128xf32, #tpu.memory_space<vmem>>, %arg3: memref<16x128xf32, #tpu.memory_space<vmem>>, %arg4: memref<1x16x128xf32, #tpu.memory_space<vmem>>) attributes {dimension_semantics = [#tpu.dimension_semantics<parallel>, #tpu.dimension_semantics<arbitrary>], iteration_bounds = array<i64: 1, 1>, scalar_prefetch = 0 : i64, scratch_operands = 0 : i64, tpu.core_type = #tpu.core_type<tc>, window_params = [{transform_indices = @transform_0, window_bounds = array<i64: 16, 128>}, {transform_indices = @transform_1, window_bounds = array<i64: 16, 128>}, {transform_indices = @transform_2, window_bounds = array<i64: 1, 16, 128>}]} {
    %c0_i32 = arith.constant 0 : i32
    %0 = arith.cmpi eq, %arg1, %c0_i32 : i32
    %1 = arith.extui %0 : i1 to i32
    %c0_i32_0 = arith.constant 0 : i32
    %2 = arith.cmpi ne, %1, %c0_i32_0 : i32
    scf.if %2 {
      %cst = arith.constant 0.000000e+00 : f32
      %13 = vector.broadcast %cst : f32 to vector<16x128xf32>
      %c0_10 = arith.constant 0 : index
      %c0_11 = arith.constant 0 : index
      %c0_12 = arith.constant 0 : index
      %14 = vector.load %arg4[%c0_10, %c0_11, %c0_12] : memref<1x16x128xf32, #tpu.memory_space<vmem>>, vector<1x16x128xf32>
      %15 = vector.shape_cast %14 : vector<1x16x128xf32> to vector<16x128xf32>
      %16 = vector.shape_cast %13 : vector<16x128xf32> to vector<1x16x128xf32>
      tpu.vector_store %arg4[%c0_10, %c0_11, %c0_12], %16 {strides = array<i32>} : memref<1x16x128xf32, #tpu.memory_space<vmem>>, vector<1x16x128xf32>,
    } else {
    }
    %c0 = arith.constant 0 : index
    %c0_1 = arith.constant 0 : index
    %3 = vector.load %arg2[%c0, %c0_1] : memref<16x128xf32, #tpu.memory_space<vmem>>, vector<16x128xf32>
    %c0_2 = arith.constant 0 : index
    %c0_3 = arith.constant 0 : index
    %4 = vector.load %arg3[%c0_2, %c0_3] : memref<16x128xf32, #tpu.memory_space<vmem>>, vector<16x128xf32>
    %5 = arith.subf %3, %4 : vector<16x128xf32>
    %c0_4 = arith.constant 0 : index
    %c0_5 = arith.constant 0 : index
    %c0_6 = arith.constant 0 : index
    %6 = vector.load %arg4[%c0_4, %c0_5, %c0_6] : memref<1x16x128xf32, #tpu.memory_space<vmem>>, vector<1x16x128xf32>
    %7 = vector.shape_cast %6 : vector<1x16x128xf32> to vector<16x128xf32>
    %8 = arith.mulf %5, %5 : vector<16x128xf32>
    %9 = arith.addf %7, %8 : vector<16x128xf32>
    %c0_7 = arith.constant 0 : index
    %c0_8 = arith.constant 0 : index
    %c0_9 = arith.constant 0 : index
    %10 = vector.load %arg4[%c0_7, %c0_8, %c0_9] : memref<1x16x128xf32, #tpu.memory_space<vmem>>, vector<1x16x128xf32>
    %11 = vector.shape_cast %10 : vector<1x16x128xf32> to vector<16x128xf32>
    %12 = vector.shape_cast %9 : vector<16x128xf32> to vector<1x16x128xf32>
    tpu.vector_store %arg4[%c0_7, %c0_8, %c0_9], %12 {strides = array<i32>} : memref<1x16x128xf32, #tpu.memory_space<vmem>>, vector<1x16x128xf32>,
    return
  }
  func.func @transform_0(%arg0: i32, %arg1: i32) -> (i32, i32) {
    %c1_i32 = arith.constant 1 : i32
    %0 = arith.muli %arg0, %c1_i32 : i32
    %1 = arith.addi %0, %arg1 : i32
    %c0_i32 = arith.constant 0 : i32
    %2 = arith.minsi %1, %c0_i32 : i32
    %c0_i32_0 = arith.constant 0 : i32
    %c0_i32_1 = arith.constant 0 : i32
    return %2, %c0_i32_0 : i32, i32
  }
  func.func @transform_1(%arg0: i32, %arg1: i32) -> (i32, i32) {
    %c1_i32 = arith.constant 1 : i32
    %0 = arith.muli %arg0, %c1_i32 : i32
    %1 = arith.addi %0, %arg1 : i32
    %c0_i32 = arith.constant 0 : i32
    %2 = arith.minsi %1, %c0_i32 : i32
    %c0_i32_0 = arith.constant 0 : i32
    %c0_i32_1 = arith.constant 0 : i32
    return %2, %c0_i32_0 : i32, i32
  }
  func.func @transform_2(%arg0: i32, %arg1: i32) -> (i32, i32, i32) {
    %c0_i32 = arith.constant 0 : i32
    %c0_i32_0 = arith.constant 0 : i32
    %c0_i32_1 = arith.constant 0 : i32
    return %arg0, %c0_i32, %c0_i32_0 : i32, i32, i32
  }
}

</mosaic_0001>

<llo_original>
// kernel: tpu_custom_call.1
$region0: #{tpu_custom_call.1}
  #allocation0 [shape = 'u32[]', space=smem, size = 0x4, offset = 0x4, fixed_abs, tag = 'smem constant byte address 0x4 - core index']
  #allocation1 [shape = 'u32[144,128]{1,0:T(1,128)}', space=vmem, size = 0x12000, scoped, tag = 'internal scratch']
  %s0 = inlined_call_operand.hbm [shape: f32[16,128], index: 0, kind: input, shape index: {}]
  %s1 = inlined_call_operand.hbm [shape: f32[16,128], index: 1, kind: input, shape index: {}]
  %s2 = inlined_call_operand.hbm [shape: f32[1,16,128], index: 2, kind: output, shape index: {}]
  %s3 = sld [smem:[#allocation0]]
  $region30: #{tpu_custom_call.1} parent=0
    _
  %s5 = ssub.s32 1, %s3
  %s6 = scalar_select 0, %s5, %s3
  $region1: #{tpu_custom_call.1} parent=0
    #allocation2 [shape = 'u8[8192]{0}', space=vmem, size = 0x2000, scoped, tag = 'input window, operand 0, single buffered']
    #allocation3 [shape = 's32[1]{0}', space=sflag, size = 0x4, scoped, tag = 'scoped memory for tpu_custom_call.1']
    #allocation4 [shape = 's32[1]{0}', space=sflag, size = 0x4, scoped, tag = 'scoped memory for tpu_custom_call.1']
    #allocation5 [shape = 'u8[8192]{0}', space=vmem, size = 0x2000, scoped, tag = 'input window, operand 1, single buffered']
    #allocation6 [shape = 's32[1]{0}', space=sflag, size = 0x4, scoped, tag = 'scoped memory for tpu_custom_call.1']
    #allocation7 [shape = 'u8[8192]{0}', space=vmem, size = 0x2000, scoped, tag = 'output window, operand 0, single buffered']
    %7 = vsyncpa [#allocation3], 0
    %8 = vsyncpa [#allocation6], 0
    %9 = vsyncpa [#allocation4], 0
    // Predicated region
    $region2: #{tpu_custom_call.1} parent=1 // pred_check
      _
    $region3: #{tpu_custom_call.1} parent=1 // pred_check_branch
      %11 = sbr.rel (0) target = $region5
    $region4: #{tpu_custom_call.1} parent=1 // pred_region
      %s12 = sadd.s32 0, 0
      %p13 = scmp.lt.s32.totalorder %s12, 0
      %s14 = scalar_select %p13, %s12, 0
      %s15 = smul.u32 2, %s14
      %s17 = ssub.s32 256, 256
      %18 = vsyncadd [#allocation3], %s17
      %s19 = smul.addr %s15, 128
      %s20 = scalar_lea.hbm %s0, %s19
      %s21 = sshll.u32 [#allocation2], 4
      %s22 = int_to_ptr.vmem [resolvable:$true] %s21
      %27 = dma.hbm_to_vmem [thread:$0]  %s20, 256, %s22, [#allocation3], 128, 128, 8
    $region5: #{tpu_custom_call.1} parent=1 // pred_fallthru
      _
    // Predicated region
    $region6: #{tpu_custom_call.1} parent=1 // pred_check
      _
    $region7: #{tpu_custom_call.1} parent=1 // pred_check_branch
      %29 = sbr.rel (0) target = $region9
    $region8: #{tpu_custom_call.1} parent=1 // pred_region
      %s30 = sadd.s32 0, 0
      %p31 = scmp.lt.s32.totalorder %s30, 0
      %s32 = scalar_select %p31, %s30, 0
      %s33 = smul.u32 2, %s32
      %s35 = ssub.s32 256, 256
      %36 = vsyncadd [#allocation6], %s35
      %s37 = smul.addr %s33, 128
      %s38 = scalar_lea.hbm %s1, %s37
      %s39 = sshll.u32 [#allocation5], 4
      %s40 = int_to_ptr.vmem [resolvable:$true] %s39
      %45 = dma.hbm_to_vmem [thread:$0]  %s38, 256, %s40, [#allocation6], 128, 128, 8
    $region9: #{tpu_custom_call.1} parent=1 // pred_fallthru
      _
    // Predicated region
    $region10: #{tpu_custom_call.1} parent=1 // pred_check
      _
    $region11: #{tpu_custom_call.1} parent=1 // pred_check_branch
      %47 = sbr.rel (0) target = $region13
    $region12: #{tpu_custom_call.1} parent=1 // pred_region
      %48 = dma.done [#allocation3], 256
    $region13: #{tpu_custom_call.1} parent=1 // pred_fallthru
      _
    // Predicated region
    $region14: #{tpu_custom_call.1} parent=1 // pred_check
      _
    $region15: #{tpu_custom_call.1} parent=1 // pred_check_branch
      %50 = sbr.rel (0) target = $region17
    $region16: #{tpu_custom_call.1} parent=1 // pred_region
      %51 = dma.done [#allocation6], 256
    $region17: #{tpu_custom_call.1} parent=1 // pred_fallthru
      _
    %s52 = sadd.s32 0, 0
    %p53 = scmp.lt.s32.totalorder %s52, 0
    %s54 = scalar_select %p53, %s52, 0
    %s55 = smul.u32 2, %s54
    %s56 = sadd.s32 0, 0
    %p57 = scmp.lt.s32.totalorder %s56, 0
    %s58 = scalar_select %p57, %s56, 0
    %s59 = smul.u32 2, %s58
    %p60 = scmp.eq.s32.totalorder 0, 0
    // Predicated region
    $region18: #{tpu_custom_call.1} parent=1 // pred_check
      %p61 = pneg %p60
    $region19: #{tpu_custom_call.1} parent=1 // pred_check_branch
      %63 = sbr.rel (%p61) target = $region21
    $region20: #{tpu_custom_call.1} parent=1 // pred_region
      %64 = vst [vmem:[#allocation7] sm:$0xff] 0.0
      %65 = vst [vmem:[#allocation7 + $0x8] sm:$0xff] 0.0
    $region21: #{tpu_custom_call.1} parent=1 // pred_fallthru
      _
    %v66 = vld [vmem:[#allocation2] sm:$0xff]
    %v67 = vld [vmem:[#allocation2 + $0x8] sm:$0xff]
    %v68 = vld [vmem:[#allocation5] sm:$0xff]
    %v69 = vld [vmem:[#allocation5 + $0x8] sm:$0xff]
    %v70 = vsub.f32 %v66, %v68
    %v71 = vsub.f32 %v67, %v69
    %v72 = vld [vmem:[#allocation7] sm:$0xff]
    %v73 = vld [vmem:[#allocation7 + $0x8] sm:$0xff]
    %v74 = vmul.f32 %v70, %v70
    %v75 = vmul.f32 %v71, %v71
    %v76 = vadd.f32 %v72, %v74
    %v77 = vadd.f32 %v73, %v75
    %78 = vst [vmem:[#allocation7] sm:$0xff] %v76
    %79 = vst [vmem:[#allocation7 + $0x8] sm:$0xff] %v77
    // Predicated region
    $region22: #{tpu_custom_call.1} parent=1 // pred_check
      _
    $region23: #{tpu_custom_call.1} parent=1 // pred_check_branch
      %81 = sbr.rel (0) target = $region25
    $region24: #{tpu_custom_call.1} parent=1 // pred_region
      %s83 = ssub.s32 256, 256
      %84 = vsyncadd [#allocation4], %s83
      %s85 = sshll.u32 [#allocation7], 4
      %s86 = int_to_ptr.vmem [resolvable:$true] %s85
      %91 = dma.vmem_to_hbm [thread:$0]  %s86, 256, %s2, [#allocation4], 128, 128, 8
    $region25: #{tpu_custom_call.1} parent=1 // pred_fallthru
      _
    // Predicated region
    $region26: #{tpu_custom_call.1} parent=1 // pred_check
      _
    $region27: #{tpu_custom_call.1} parent=1 // pred_check_branch
      %93 = sbr.rel (0) target = $region29
    $region28: #{tpu_custom_call.1} parent=1 // pred_region
      %94 = dma.done [#allocation4], 256
    $region29: #{tpu_custom_call.1} parent=1 // pred_fallthru
      _
    %95 = vsyncpa [#allocation3], 1
    %96 = vsyncpa [#allocation6], 1
    %97 = vsyncpa [#allocation4], 1

</llo_original>
